<compile_context>
chip_gen: v5e
topology: v5e:2x2
jax: 0.10.0
libtpu: 0.0.40
codegen_flags: <defaults>
</compile_context>

<pallas_src>
import math

import jax
import jax.numpy as jnp
import numpy as np
from jax.experimental import pallas as pl
from jax.experimental.pallas import tpu as pltpu

_LANE = 128
_SUBLANE = 8
_BLOCK_BYTES = 4 * 1024 * 1024      # per-x-block budget (v6e/v7x sweet spot)
_VMEM_LIMIT = 32 * 1024 * 1024      # fits in/out double buffers on v5e too
_MIN_GRID_STEPS = 4                 # keep both v7x TensorCores busy


def _round_up(v, m):
    return ((v + m - 1) // m) * m


# ----------------------------------------------------------------------------
# Kernel: y = x * (1 + noise), noise broadcast over the batch dimension.
# Works for both the (N, tr, 128) / (tr, 128) and (N, tf) / (1, tf) layouts.
# ----------------------------------------------------------------------------
def _feature_noise_kernel(x_ref, noise_ref, o_ref):
    gain = noise_ref[...].astype(jnp.float32) + 1.0     # once per block
    x = x_ref[...].astype(jnp.float32)
    if gain.ndim < x.ndim:                               # (tr,128) -> (1,tr,128)
        gain = gain[None]
    o_ref[...] = (x * gain).astype(o_ref.dtype)          # == x.mul(noise) + x


def feature_noise_apply(x, noise):
    """y = x * noise + x with `noise` of shape x.shape[1:] (shared over batch)."""
    N = x.shape[0]
    F = int(math.prod(x.shape[1:]))
    itemsize = x.dtype.itemsize

    compiler_params = pltpu.CompilerParams(
        dimension_semantics=("parallel",),
        vmem_limit_bytes=_VMEM_LIMIT,
    )

    if F % _LANE == 0:
        # Lane/sublane-dense main path: features viewed as (R, 128) rows.
        R = F // _LANE
        x3 = x.reshape(N, R, _LANE)              # contiguous -> free reshape
        n3 = noise.reshape(R, _LANE)

        bytes_per_row = N * _LANE * itemsize
        tr = max(_SUBLANE,
                 (_BLOCK_BYTES // bytes_per_row) // _SUBLANE * _SUBLANE)
        # Keep >= _MIN_GRID_STEPS grid steps (megacore + pipelining) when the
        # tile can stay >= 128 rows (>= 64 KiB contiguous DMA per batch row).
        if pl.cdiv(R, tr) < _MIN_GRID_STEPS and R >= _MIN_GRID_STEPS * 128:
            tr = max(128, _round_up(pl.cdiv(R, _MIN_GRID_STEPS), _SUBLANE))
        tr = min(tr, _round_up(R, _SUBLANE))
        grid = (pl.cdiv(R, tr),)                 # partial last block is masked

        out = pl.pallas_call(
            _feature_noise_kernel,
            out_shape=jax.ShapeDtypeStruct((N, R, _LANE), x.dtype),
            grid=grid,
            in_specs=[
                pl.BlockSpec((N, tr, _LANE), lambda j: (0, j, 0)),
                pl.BlockSpec((tr, _LANE), lambda j: (j, 0)),
            ],
            out_specs=pl.BlockSpec((N, tr, _LANE), lambda j: (0, j, 0)),
            compiler_params=compiler_params,
        )(x3, n3)
        return out.reshape(x.shape)

    # Fallback for F not a multiple of 128: 2-D view, cdiv grid, masked
    # partial last block (no jnp.pad / slice HBM round trips).
    x2 = x.reshape(N, F)
    n2 = noise.reshape(1, F)
    # The (1, tf) noise block is sublane-padded to 8 rows -> count it.
    bytes_per_col = (max(N, _SUBLANE) + _SUBLANE) * itemsize
    tf = max(_LANE, (_BLOCK_BYTES // bytes_per_col) // _LANE * _LANE)
    tf = min(tf, _round_up(F, _LANE))
    grid = (pl.cdiv(F, tf),)

    out = pl.pallas_call(
        _feature_noise_kernel,
        out_shape=jax.ShapeDtypeStruct((N, F), x.dtype),
        grid=grid,
        in_specs=[
            pl.BlockSpec((N, tf), lambda j: (0, j)),
            pl.BlockSpec((1, tf), lambda j: (0, j)),
        ],
        out_specs=pl.BlockSpec((N, tf), lambda j: (0, j)),
        compiler_params=compiler_params,
    )(x2, n2)
    return out.reshape(x.shape)


def feature_noise(x, key, *, uniform_range=0.3):
    """FeatureNoise.forward: x (N, C, H, W) -> same shape/dtype."""
    noise = jax.random.uniform(
        key, x.shape[1:], dtype=jnp.float32,
        minval=-uniform_range, maxval=uniform_range)
    return feature_noise_apply(x, noise)


# ----------------------------------------------------------------------------
if __name__ == "__main__":
    root = jax.random.PRNGKey(0)
    k_x, k_noise = jax.random.split(root)

    batch, C, H, W = 2, 4, 16, 16
    r = 0.3
    x = jax.random.normal(k_x, (batch, C, H, W), jnp.float32)

    fwd = jax.jit(feature_noise)
    y = fwd(x, k_noise)
    jax.block_until_ready(y)
    assert y.shape == x.shape and y.dtype == x.dtype, (y.shape, y.dtype)

    # Reference: same sampler / same key -> identical noise vector, broadcast
    # over the batch like the module's unsqueeze(0).
    noise_ref = jax.random.uniform(k_noise, x.shape[1:], dtype=jnp.float32,
                                   minval=-r, maxval=r)
    x_np = np.asarray(x)
    y_np = np.asarray(y)
    y_ref = x_np * np.asarray(noise_ref)[None] + x_np
    np.testing.assert_allclose(y_np, y_ref, rtol=1e-6, atol=1e-6)

    # Recovered noise = y/x - 1 must lie in [-r, r) and be the SAME vector for
    # every batch element (module shares the noise across the batch).
    mask = np.abs(x_np) > 1e-2
    rec = np.where(mask, y_np / np.where(mask, x_np, 1.0) - 1.0, 0.0)
    assert np.all(rec[mask] >= -r - 1e-3) and np.all(rec[mask] <= r + 1e-3)
    both = mask[0] & mask[1]
    if np.any(both):
        assert np.max(np.abs(rec[0][both] - rec[1][both])) < 1e-4

    print("KERNEL_OK")
</pallas_src>

<mosaic_0001>
module attributes {stable_mosaic.version = 11 : i64} {
  func.func @_feature_noise_kernel(%arg0: i32, %arg1: memref<2x8x128xf32, #tpu.memory_space<vmem>>, %arg2: memref<8x128xf32, #tpu.memory_space<vmem>>, %arg3: memref<2x8x128xf32, #tpu.memory_space<vmem>>) attributes {dimension_semantics = [#tpu.dimension_semantics<parallel>], iteration_bounds = array<i64: 1>, scalar_prefetch = 0 : i64, scratch_operands = 0 : i64, tpu.core_type = #tpu.core_type<tc>, window_params = [{transform_indices = @transform_0, window_bounds = array<i64: 2, 8, 128>}, {transform_indices = @transform_1, window_bounds = array<i64: 8, 128>}, {transform_indices = @transform_2, window_bounds = array<i64: 2, 8, 128>}]} {
    %c0 = arith.constant 0 : index
    %c0_0 = arith.constant 0 : index
    %0 = vector.load %arg2[%c0, %c0_0] : memref<8x128xf32, #tpu.memory_space<vmem>>, vector<8x128xf32>
    %cst = arith.constant 1.000000e+00 : f32
    %1 = vector.broadcast %cst : f32 to vector<8x128xf32>
    %2 = arith.addf %0, %1 : vector<8x128xf32>
    %c0_1 = arith.constant 0 : index
    %c0_2 = arith.constant 0 : index
    %c0_3 = arith.constant 0 : index
    %3 = vector.load %arg1[%c0_1, %c0_2, %c0_3] : memref<2x8x128xf32, #tpu.memory_space<vmem>>, vector<2x8x128xf32>
    %4 = vector.shape_cast %2 : vector<8x128xf32> to vector<1x8x128xf32>
    %5 = vector.broadcast %4 : vector<1x8x128xf32> to vector<2x8x128xf32>
    %6 = arith.mulf %3, %5 : vector<2x8x128xf32>
    %c0_4 = arith.constant 0 : index
    %c0_5 = arith.constant 0 : index
    %c0_6 = arith.constant 0 : index
    %7 = vector.load %arg3[%c0_4, %c0_5, %c0_6] : memref<2x8x128xf32, #tpu.memory_space<vmem>>, vector<2x8x128xf32>
    tpu.vector_store %arg3[%c0_4, %c0_5, %c0_6], %6 {strides = array<i32>} : memref<2x8x128xf32, #tpu.memory_space<vmem>>, vector<2x8x128xf32>,
    return
  }
  func.func @transform_0(%arg0: i32) -> (i32, i32, i32) {
    %c0_i32 = arith.constant 0 : i32
    %c0_i32_0 = arith.constant 0 : i32
    %c0_i32_1 = arith.constant 0 : i32
    return %c0_i32, %arg0, %c0_i32_0 : i32, i32, i32
  }
  func.func @transform_1(%arg0: i32) -> (i32, i32) {
    %c0_i32 = arith.constant 0 : i32
    %c0_i32_0 = arith.constant 0 : i32
    return %arg0, %c0_i32 : i32, i32
  }
  func.func @transform_2(%arg0: i32) -> (i32, i32, i32) {
    %c0_i32 = arith.constant 0 : i32
    %c0_i32_0 = arith.constant 0 : i32
    %c0_i32_1 = arith.constant 0 : i32
    return %c0_i32, %arg0, %c0_i32_0 : i32, i32, i32
  }
}

</mosaic_0001>

<llo_original>
// kernel: feature_noise.1
$region0: #{feature_noise.1}
  #allocation0 [shape = 'u32[]', space=smem, size = 0x4, offset = 0x4, fixed_abs, tag = 'smem constant byte address 0x4 - core index']
  #allocation1 [shape = 'u32[72,128]{1,0:T(1,128)}', space=vmem, size = 0x9000, scoped, tag = 'internal scratch']
  %s0 = inlined_call_operand.vmem [shape: f32[2,8,128], index: 0, kind: input, shape index: {}]
  %s1 = inlined_call_operand.vmem [shape: f32[8,128], index: 1, kind: input, shape index: {}]
  %s2 = inlined_call_operand.vmem [shape: f32[2,8,128], index: 2, kind: output, shape index: {}]
  %s3 = sld [smem:[#allocation0]]
  $region18: #{feature_noise.1} parent=0
    _
  %s5 = ssub.s32 1, %s3
  %s6 = scalar_select 0, %s5, %s3
  // Predicated region
  $region2: #{feature_noise.1} parent=0 // pred_check
    _
  $region3: #{feature_noise.1} parent=0 // pred_check_branch
    %8 = sbr.rel (0) target = $region5
  $region4: #{feature_noise.1} parent=0 // pred_region
    _
  $region5: #{feature_noise.1} parent=0 // pred_fallthru
    _
  // Predicated region
  $region6: #{feature_noise.1} parent=0 // pred_check
    _
  $region7: #{feature_noise.1} parent=0 // pred_check_branch
    %10 = sbr.rel (0) target = $region9
  $region8: #{feature_noise.1} parent=0 // pred_region
    _
  $region9: #{feature_noise.1} parent=0 // pred_fallthru
    _
  %v11 = vld [vmem:[%s1] sm:$0xff]
  %v12 = vadd.f32 %v11, 1.0
  %v13 = vld [vmem:[%s0] sm:$0xff]
  %v14 = vld [vmem:[%s0 + $0x8] sm:$0xff]
  %v15 = vmul.f32 %v13, %v12
  %v16 = vmul.f32 %v14, %v12
  %17 = vst [vmem:[%s2] sm:$0xff] %v15
  %18 = vst [vmem:[%s2 + $0x8] sm:$0xff] %v16
  // Predicated region
  $region10: #{feature_noise.1} parent=0 // pred_check
    _
  $region11: #{feature_noise.1} parent=0 // pred_check_branch
    %20 = sbr.rel (0) target = $region13
  $region12: #{feature_noise.1} parent=0 // pred_region
    _
  $region13: #{feature_noise.1} parent=0 // pred_fallthru
    _
  // Predicated region
  $region14: #{feature_noise.1} parent=0 // pred_check
    _
  $region15: #{feature_noise.1} parent=0 // pred_check_branch
    %22 = sbr.rel (0) target = $region17
  $region16: #{feature_noise.1} parent=0 // pred_region
    _
  $region17: #{feature_noise.1} parent=0 // pred_fallthru
    _

</llo_original>
